<compile_context>
chip_gen: v5e
topology: v5e:2x2
jax: 0.10.0
libtpu: 0.0.40
codegen_flags: <defaults>
</compile_context>

<pallas_src>
import functools

import jax
import jax.numpy as jnp
from jax.experimental import pallas as pl
from jax.experimental.pallas import tpu as pltpu

_LN2 = 0.6931472


def _cdiv(a, b):
    return (a + b - 1) // b


def _round_up(a, b):
    return _cdiv(a, b) * b


def _block_diag(w, p):
    """(din, dout) -> (p*din, p*dout) block-diagonal with p copies of w."""
    din, dout = w.shape
    eye = jnp.eye(p, dtype=w.dtype)
    out = eye[:, None, :, None] * w[None, :, None, :]
    return out.reshape(p * din, p * dout)


def encoder_kernel(x_ref, w1_ref, b1_ref, w2_ref, b2_ref, g_ref, bcast_ref,
                   gsum_ref, out_ref, *, cluster_num):
    x = x_ref[...]

    # theta: tanh(x @ W1 + b1)          (lane-dense: K = P*H, N = P*D1)
    h = jnp.tanh(
        jnp.dot(x, w1_ref[...], preferred_element_type=jnp.float32) + b1_ref[...]
    )

    # theta_p pre-activation z; softplus(z) itself is never materialized — its
    # log is folded into the softmax exponent below (one less EUP op/lane).
    z = jnp.dot(h, w2_ref[...], preferred_element_type=jnp.float32) + b2_ref[...]
    g = g_ref[...].astype(jnp.float32)

    tb, w = z.shape
    c = cluster_num
    ngroups = w // c

    # Collapsed double softmax:
    #   softmax_c((log(softmax_c(softplus(z)) + eps) + g) / 0.1)
    #     == softmax_c((softplus(z) + g) * 10)    [eps negligible, shift-inv]
    # EUP-reduced numerator: with m >= softplus(z)+g per cluster group,
    #   exp(10*(softplus(z)+g) - 10*m) == (exp(g-m) + exp(z+g-m)) ** 10
    # Using m = max_group(max(z,0)+g) + ln2 (softplus(z) <= max(z,0)+ln2) keeps
    # both exp args <= -ln2 (no overflow) and the group-max numerator >= ~1e-3
    # (denominator never collapses to zero).
    bound = jnp.maximum(z, 0.0) + g + _LN2
    m = jnp.max(bound.reshape(tb, ngroups, c), axis=-1)               # (tb, ngroups)
    # TODO(synk): the lane-dim reshape for the group max may materialize a
    # small relayout; per the bundle it stays hidden under EUP/DMA, revisit
    # only if it shows on the critical slot.
    # Broadcast the group max back to full 128-lane width on the idle MXU.
    m_b = jnp.dot(m, bcast_ref[...], preferred_element_type=jnp.float32)  # (tb, w)

    a1 = g - m_b
    s = jnp.exp(a1) + jnp.exp(z + a1)        # == exp(softplus(z)+g-m), 2 EUP ops
    s2 = s * s
    s4 = s2 * s2
    e = (s4 * s4) * s2                       # s**10 via 4 VPU multiplies

    # Segmented per-group sum, broadcast to every lane of its group, via a
    # (w, w) 0/1 same-group matrix on the MXU (exact: sums of c f32 terms).
    denom = jnp.dot(e, gsum_ref[...], preferred_element_type=jnp.float32)

    # Approx reciprocal (EUP) + one Newton step (VPU): per-group probabilities
    # now sum to 1 to ~1e-6 (the bare approx rcp caused the previous failure).
    inv = pl.reciprocal(denom, approx=True)
    inv = inv * (2.0 - denom * inv)
    out_ref[...] = (e * inv).astype(out_ref.dtype)


def encoder_forward(x, w1, b1, w2, b2, g, *, code_book_len, cluster_num,
                    block_rows=1024):
    """Forward pass of Encoder.

    x:  (B, hidden_dim) f32
    w1: (hidden_dim, L*C//2), b1: (1, L*C//2)   -- theta   (stored as (in, out))
    w2: (L*C//2, L*C),        b2: (1, L*C)      -- theta_p (stored as (in, out))
    g:  (B, L*C) or (B, L, C) gumbel noise (any float dtype; streamed as bf16).
    Returns (B, code_book_len, cluster_num) f32.
    """
    B, H = x.shape
    D1 = w1.shape[1]
    D2 = w2.shape[1]
    assert D2 == code_book_len * cluster_num

    x = x.astype(jnp.float32)
    # Gumbel noise streamed as bf16: ~40% of the per-row input bytes gone.
    g2 = g.reshape(B, D2).astype(jnp.bfloat16)

    # Lane-packing factor: put P logical rows side by side so the working set
    # is 128 lanes wide (D2=64 -> P=2) and stores are unmasked full-width vst.
    if D2 < 128 and 128 % D2 == 0:
        P = 128 // D2
    else:
        P = 1
    W = P * D2
    C = cluster_num
    n_groups = W // C

    # Pad only to a multiple of P (needed for the packing reshape; usually a
    # no-op).  No full-tile padding: the ragged last grid block is handled by
    # pl.cdiv + masked stores and the garbage rows are sliced off below.
    B_pad = _round_up(B, P)
    if B_pad != B:
        pad = B_pad - B
        x = jnp.concatenate([x, jnp.zeros((pad, H), x.dtype)], axis=0)
        g2 = jnp.concatenate([g2, jnp.zeros((pad, D2), g2.dtype)], axis=0)
    Bp = B_pad // P

    # Free row-major reshapes: P logical rows packed per kernel row.
    xp = x.reshape(Bp, P * H)
    gp = g2.reshape(Bp, W)

    # Block-diagonal weights / tiled biases so the packed matmuls are exact
    # copies of the per-row Linear layers (layout plumbing, done once).
    w1p = _block_diag(w1.astype(jnp.float32), P)          # (P*H,  P*D1)
    w2p = _block_diag(w2.astype(jnp.float32), P)          # (P*D1, W)
    b1p = jnp.tile(b1.reshape(1, D1).astype(jnp.float32), (1, P))
    b2p = jnp.tile(b2.reshape(1, D2).astype(jnp.float32), (1, P))

    # 0/1 matrices for MXU-offloaded segmented reductions/broadcasts.
    lane = jnp.arange(W)
    grp = jnp.arange(n_groups)
    bcast_mat = (lane[None, :] // C == grp[:, None]).astype(jnp.float32)       # (n_groups, W)
    gsum_mat = (lane[:, None] // C == lane[None, :] // C).astype(jnp.float32)  # (W, W)

    # Packed-row tile: as big as block_rows allows (multiple of 16 sublanes for
    # the bf16 gumbel stream), but keep >= 8 grid steps (>= 4 per TensorCore on
    # v7x) when shrinking the tile does not drop it below 256 rows.
    TBp = max(16, _round_up(min(block_rows, Bp), 16))
    if _cdiv(Bp, TBp) < 8 and Bp >= 8 * 256:
        TBp = max(256, _round_up(_cdiv(Bp, 8), 16))
    grid = (pl.cdiv(Bp, TBp),)

    PH, PD1 = P * H, P * D1
    cost = pl.CostEstimate(
        flops=2 * Bp * (PH * PD1 + PD1 * W + n_groups * W + W * W),
        transcendentals=Bp * (PD1 + 3 * W),          # tanh + 2 exps + rcp
        bytes_accessed=(xp.size * 4 + gp.size * 2 + Bp * W * 4
                        + (w1p.size + w2p.size + b1p.size + b2p.size
                           + bcast_mat.size + gsum_mat.size) * 4),
    )

    kernel = functools.partial(encoder_kernel, cluster_num=cluster_num)

    out = pl.pallas_call(
        kernel,
        out_shape=jax.ShapeDtypeStruct((Bp, W), jnp.float32),
        grid_spec=pltpu.PrefetchScalarGridSpec(
            num_scalar_prefetch=0,
            grid=grid,
            in_specs=[
                pl.BlockSpec((TBp, PH), lambda i: (i, 0)),       # x (packed, streamed)
                pl.BlockSpec((PH, PD1), lambda i: (0, 0)),       # W1 block-diag (resident)
                pl.BlockSpec((1, PD1), lambda i: (0, 0)),        # b1 tiled
                pl.BlockSpec((PD1, W), lambda i: (0, 0)),        # W2 block-diag (resident)
                pl.BlockSpec((1, W), lambda i: (0, 0)),          # b2 tiled
                pl.BlockSpec((TBp, W), lambda i: (i, 0)),        # gumbel noise (bf16, streamed)
                pl.BlockSpec((n_groups, W), lambda i: (0, 0)),   # group->lane broadcast
                pl.BlockSpec((W, W), lambda i: (0, 0)),          # same-group 0/1 matrix
            ],
            out_specs=pl.BlockSpec((TBp, W), lambda i: (i, 0)),
        ),
        compiler_params=pltpu.CompilerParams(
            dimension_semantics=("parallel",),
        ),
        cost_estimate=cost,
    )(xp, w1p, b1p, w2p, b2p, gp, bcast_mat, gsum_mat)

    y = out.reshape(B_pad, D2)[:B]
    return y.reshape(B, code_book_len, cluster_num)


def encoder_reference(x, w1, b1, w2, b2, g, *, code_book_len, cluster_num):
    """Plain-JAX reference with the ORIGINAL module semantics (double softmax)."""
    eps = 1e-10
    h = jnp.tanh(x @ w1 + b1)
    a = jax.nn.softplus(h @ w2 + b2)
    a = a.reshape(-1, code_book_len, cluster_num)
    a = jax.nn.softmax(a, axis=2)
    logits = jnp.log(a + eps) + g.reshape(-1, code_book_len, cluster_num)
    return jax.nn.softmax(logits / 0.1, axis=2)


if __name__ == "__main__":
    # Small shapes consistent with the module.
    batch = 64
    hidden_dim = 32
    cluster_num = 8
    code_book_len = 8
    D1 = cluster_num * code_book_len // 2   # 32
    D2 = cluster_num * code_book_len        # 64

    key = jax.random.PRNGKey(0)
    kx, kw1, kb1, kw2, kb2, kg = jax.random.split(key, 6)

    x = jax.random.normal(kx, (batch, hidden_dim), dtype=jnp.float32)
    # Linear weights stored pre-transposed as (in, out).
    w1 = jax.random.normal(kw1, (hidden_dim, D1), dtype=jnp.float32) * 0.1
    b1 = jax.random.normal(kb1, (1, D1), dtype=jnp.float32) * 0.1
    w2 = jax.random.normal(kw2, (D1, D2), dtype=jnp.float32) * 0.1
    b2 = jax.random.normal(kb2, (1, D2), dtype=jnp.float32) * 0.1

    # Gumbel noise g = -log(-log(u + eps) + eps), u ~ U(0,1); sampled outside
    # the kernel so the result is exactly verifiable against the reference.
    # Pre-rounded to bf16 because the kernel streams it as bf16 (the same
    # rounded values are fed to the reference, so the comparison is exact).
    # TODO(synk): for max HBM savings g could be generated in-kernel with
    # pltpu.prng_seed/prng_random_bits (seed via scalar prefetch), at the cost
    # of bit-verifiability and ~2 extra EUP ops per element.
    eps = 1e-10
    u = jax.random.uniform(kg, (batch, D2), dtype=jnp.float32)
    g = (-jnp.log(-jnp.log(u + eps) + eps)).astype(jnp.bfloat16)
    g_f32 = g.astype(jnp.float32)

    # block_rows=16 packed rows -> 2 grid steps at this toy size (exercises
    # pipelining + parallel semantics).  At real batch sizes keep the default.
    y = encoder_forward(
        x, w1, b1, w2, b2, g,
        code_book_len=code_book_len, cluster_num=cluster_num, block_rows=16,
    )
    y = jax.block_until_ready(y)

    y_ref = encoder_reference(
        x, w1, b1, w2, b2, g_f32,
        code_book_len=code_book_len, cluster_num=cluster_num,
    )
    assert y.shape == (batch, code_book_len, cluster_num)
    # Tolerance covers the dropped eps term of the collapsed double softmax and
    # the f32 numerical-path differences (both << 1e-3 here).
    assert jnp.allclose(y, y_ref, atol=2e-3, rtol=2e-3)
    # Outputs are per-group probability distributions (Newton-refined recip).
    assert jnp.allclose(jnp.sum(y, axis=2), 1.0, atol=2e-3)
    print("KERNEL_OK")
</pallas_src>

<mosaic_0001>
module attributes {stable_mosaic.version = 11 : i64} {
  func.func @encoder_kernel(%arg0: i32, %arg1: memref<16x64xf32, #tpu.memory_space<vmem>>, %arg2: memref<64x64xf32, #tpu.memory_space<vmem>>, %arg3: memref<1x64xf32, #tpu.memory_space<vmem>>, %arg4: memref<64x128xf32, #tpu.memory_space<vmem>>, %arg5: memref<1x128xf32, #tpu.memory_space<vmem>>, %arg6: memref<16x128xbf16, #tpu.memory_space<vmem>>, %arg7: memref<16x128xf32, #tpu.memory_space<vmem>>, %arg8: memref<128x128xf32, #tpu.memory_space<vmem>>, %arg9: memref<16x128xf32, #tpu.memory_space<vmem>>) attributes {dimension_semantics = [#tpu.dimension_semantics<parallel>], iteration_bounds = array<i64: 2>, scalar_prefetch = 0 : i64, scratch_operands = 0 : i64, tpu.core_type = #tpu.core_type<tc>, window_params = [{transform_indices = @transform_0, window_bounds = array<i64: 16, 64>}, {pipeline_mode = #tpu.pipeline_mode<synchronous>, transform_indices = @transform_1, window_bounds = array<i64: 64, 64>}, {pipeline_mode = #tpu.pipeline_mode<synchronous>, transform_indices = @transform_2, window_bounds = array<i64: 1, 64>}, {pipeline_mode = #tpu.pipeline_mode<synchronous>, transform_indices = @transform_3, window_bounds = array<i64: 64, 128>}, {pipeline_mode = #tpu.pipeline_mode<synchronous>, transform_indices = @transform_4, window_bounds = array<i64: 1, 128>}, {transform_indices = @transform_5, window_bounds = array<i64: 16, 128>}, {pipeline_mode = #tpu.pipeline_mode<synchronous>, transform_indices = @transform_6, window_bounds = array<i64: 16, 128>}, {pipeline_mode = #tpu.pipeline_mode<synchronous>, transform_indices = @transform_7, window_bounds = array<i64: 128, 128>}, {transform_indices = @transform_8, window_bounds = array<i64: 16, 128>}]} {
    %c0 = arith.constant 0 : index
    %c0_0 = arith.constant 0 : index
    %0 = vector.load %arg1[%c0, %c0_0] : memref<16x64xf32, #tpu.memory_space<vmem>>, vector<16x64xf32>
    %c0_1 = arith.constant 0 : index
    %c0_2 = arith.constant 0 : index
    %1 = vector.load %arg2[%c0_1, %c0_2] : memref<64x64xf32, #tpu.memory_space<vmem>>, vector<64x64xf32>
    %cst = arith.constant dense<0.000000e+00> : vector<16x64xf32>
    %2 = tpu.matmul %0, %1, %cst {dimension_numbers = #tpu.dot_dimension_numbers<[1], [0], [0], [1], [0, 0, 1, 1], [], []>} : vector<16x64xf32>, vector<64x64xf32>, vector<16x64xf32> -> vector<16x64xf32>
    %c0_3 = arith.constant 0 : index
    %c0_4 = arith.constant 0 : index
    %3 = vector.load %arg3[%c0_3, %c0_4] : memref<1x64xf32, #tpu.memory_space<vmem>>, vector<1x64xf32>
    %4 = vector.broadcast %3 : vector<1x64xf32> to vector<16x64xf32>
    %5 = arith.addf %2, %4 : vector<16x64xf32>
    %6 = math.tanh %5 : vector<16x64xf32>
    %c0_5 = arith.constant 0 : index
    %c0_6 = arith.constant 0 : index
    %7 = vector.load %arg4[%c0_5, %c0_6] : memref<64x128xf32, #tpu.memory_space<vmem>>, vector<64x128xf32>
    %cst_7 = arith.constant dense<0.000000e+00> : vector<16x128xf32>
    %8 = tpu.matmul %6, %7, %cst_7 {dimension_numbers = #tpu.dot_dimension_numbers<[1], [0], [0], [1], [0, 0, 1, 1], [], []>} : vector<16x64xf32>, vector<64x128xf32>, vector<16x128xf32> -> vector<16x128xf32>
    %c0_8 = arith.constant 0 : index
    %c0_9 = arith.constant 0 : index
    %9 = vector.load %arg5[%c0_8, %c0_9] : memref<1x128xf32, #tpu.memory_space<vmem>>, vector<1x128xf32>
    %10 = vector.broadcast %9 : vector<1x128xf32> to vector<16x128xf32>
    %11 = arith.addf %8, %10 : vector<16x128xf32>
    %c0_10 = arith.constant 0 : index
    %c0_11 = arith.constant 0 : index
    %12 = vector.load %arg6[%c0_10, %c0_11] : memref<16x128xbf16, #tpu.memory_space<vmem>>, vector<16x128xbf16>
    %13 = arith.extf %12 : vector<16x128xbf16> to vector<16x128xf32>
    %cst_12 = arith.constant 0.000000e+00 : f32
    %14 = vector.broadcast %cst_12 : f32 to vector<16x128xf32>
    %15 = arith.maximumf %11, %14 : vector<16x128xf32>
    %16 = arith.addf %15, %13 : vector<16x128xf32>
    %cst_13 = arith.constant 0.693147182 : f32
    %17 = vector.broadcast %cst_13 : f32 to vector<16x128xf32>
    %18 = arith.addf %16, %17 : vector<16x128xf32>
    %19 = vector.shape_cast %18 : vector<16x128xf32> to vector<16x16x8xf32>
    %cst_14 = arith.constant dense<0xFF800000> : vector<16x16xf32>
    %20 = vector.multi_reduction <maximumf>, %19, %cst_14 [2] : vector<16x16x8xf32> to vector<16x16xf32>
    %c0_15 = arith.constant 0 : index
    %c0_16 = arith.constant 0 : index
    %21 = vector.load %arg7[%c0_15, %c0_16] : memref<16x128xf32, #tpu.memory_space<vmem>>, vector<16x128xf32>
    %cst_17 = arith.constant dense<0.000000e+00> : vector<16x128xf32>
    %22 = tpu.matmul %20, %21, %cst_17 {dimension_numbers = #tpu.dot_dimension_numbers<[1], [0], [0], [1], [0, 0, 1, 1], [], []>} : vector<16x16xf32>, vector<16x128xf32>, vector<16x128xf32> -> vector<16x128xf32>
    %23 = arith.subf %13, %22 : vector<16x128xf32>
    %24 = math.exp %23 : vector<16x128xf32>
    %25 = arith.addf %11, %23 : vector<16x128xf32>
    %26 = math.exp %25 : vector<16x128xf32>
    %27 = arith.addf %24, %26 : vector<16x128xf32>
    %28 = arith.mulf %27, %27 : vector<16x128xf32>
    %29 = arith.mulf %28, %28 : vector<16x128xf32>
    %30 = arith.mulf %29, %29 : vector<16x128xf32>
    %31 = arith.mulf %30, %28 : vector<16x128xf32>
    %c0_18 = arith.constant 0 : index
    %c0_19 = arith.constant 0 : index
    %32 = vector.load %arg8[%c0_18, %c0_19] : memref<128x128xf32, #tpu.memory_space<vmem>>, vector<128x128xf32>
    %cst_20 = arith.constant dense<0.000000e+00> : vector<16x128xf32>
    %33 = tpu.matmul %31, %32, %cst_20 {dimension_numbers = #tpu.dot_dimension_numbers<[1], [0], [0], [1], [0, 0, 1, 1], [], []>} : vector<16x128xf32>, vector<128x128xf32>, vector<16x128xf32> -> vector<16x128xf32>
    %34 = tpu.reciprocal %33 {approx = true} : vector<16x128xf32> -> vector<16x128xf32>
    %35 = arith.mulf %33, %34 : vector<16x128xf32>
    %cst_21 = arith.constant 2.000000e+00 : f32
    %36 = vector.broadcast %cst_21 : f32 to vector<16x128xf32>
    %37 = arith.subf %36, %35 : vector<16x128xf32>
    %38 = arith.mulf %34, %37 : vector<16x128xf32>
    %39 = arith.mulf %31, %38 : vector<16x128xf32>
    %c0_22 = arith.constant 0 : index
    %c0_23 = arith.constant 0 : index
    %40 = vector.load %arg9[%c0_22, %c0_23] : memref<16x128xf32, #tpu.memory_space<vmem>>, vector<16x128xf32>
    tpu.vector_store %arg9[%c0_22, %c0_23], %39 {strides = array<i32>} : memref<16x128xf32, #tpu.memory_space<vmem>>, vector<16x128xf32>,
    return
  }
  func.func @transform_0(%arg0: i32) -> (i32, i32) {
    %c0_i32 = arith.constant 0 : i32
    %c0_i32_0 = arith.constant 0 : i32
    return %arg0, %c0_i32 : i32, i32
  }
  func.func @transform_1(%arg0: i32) -> (i32, i32) {
    %c0_i32 = arith.constant 0 : i32
    %c0_i32_0 = arith.constant 0 : i32
    %c0_i32_1 = arith.constant 0 : i32
    return %c0_i32, %c0_i32_0 : i32, i32
  }
  func.func @transform_2(%arg0: i32) -> (i32, i32) {
    %c0_i32 = arith.constant 0 : i32
    %c0_i32_0 = arith.constant 0 : i32
    %c0_i32_1 = arith.constant 0 : i32
    return %c0_i32, %c0_i32_0 : i32, i32
  }
  func.func @transform_3(%arg0: i32) -> (i32, i32) {
    %c0_i32 = arith.constant 0 : i32
    %c0_i32_0 = arith.constant 0 : i32
    %c0_i32_1 = arith.constant 0 : i32
    return %c0_i32, %c0_i32_0 : i32, i32
  }
  func.func @transform_4(%arg0: i32) -> (i32, i32) {
    %c0_i32 = arith.constant 0 : i32
    %c0_i32_0 = arith.constant 0 : i32
    %c0_i32_1 = arith.constant 0 : i32
    return %c0_i32, %c0_i32_0 : i32, i32
  }
  func.func @transform_5(%arg0: i32) -> (i32, i32) {
    %c0_i32 = arith.constant 0 : i32
    %c0_i32_0 = arith.constant 0 : i32
    return %arg0, %c0_i32 : i32, i32
  }
  func.func @transform_6(%arg0: i32) -> (i32, i32) {
    %c0_i32 = arith.constant 0 : i32
    %c0_i32_0 = arith.constant 0 : i32
    %c0_i32_1 = arith.constant 0 : i32
    return %c0_i32, %c0_i32_0 : i32, i32
  }
  func.func @transform_7(%arg0: i32) -> (i32, i32) {
    %c0_i32 = arith.constant 0 : i32
    %c0_i32_0 = arith.constant 0 : i32
    %c0_i32_1 = arith.constant 0 : i32
    return %c0_i32, %c0_i32_0 : i32, i32
  }
  func.func @transform_8(%arg0: i32) -> (i32, i32) {
    %c0_i32 = arith.constant 0 : i32
    %c0_i32_0 = arith.constant 0 : i32
    return %arg0, %c0_i32 : i32, i32
  }
}

</mosaic_0001>

<llo_original>
// kernel: tpu_custom_call.1
$region0: #{tpu_custom_call.1}
  #allocation0 [shape = 'u32[]', space=smem, size = 0x4, offset = 0x4, fixed_abs, tag = 'smem constant byte address 0x4 - core index']
  #allocation1 [shape = 'u32[72,128]{1,0:T(1,128)}', space=vmem, size = 0x9000, scoped, tag = 'internal scratch']
  %s0 = inlined_call_operand.hbm [shape: f32[32,64], index: 0, kind: input, shape index: {}]
  %s1 = inlined_call_operand.hbm [shape: f32[64,64], index: 1, kind: input, shape index: {}]
  %s2 = inlined_call_operand.vmem [shape: f32[1,64], index: 2, kind: input, shape index: {}]
  %s3 = inlined_call_operand.hbm [shape: f32[64,128], index: 3, kind: input, shape index: {}]
  %s4 = inlined_call_operand.vmem [shape: f32[1,128], index: 4, kind: input, shape index: {}]
  %s5 = inlined_call_operand.hbm [shape: bf16[32,128], index: 5, kind: input, shape index: {}]
  %s6 = inlined_call_operand.hbm [shape: f32[16,128], index: 6, kind: input, shape index: {}]
  %s7 = inlined_call_operand.hbm [shape: f32[128,128], index: 7, kind: input, shape index: {}]
  %s8 = inlined_call_operand.hbm [shape: f32[32,128], index: 8, kind: output, shape index: {}]
  %s9 = sld [smem:[#allocation0]]
  $region89: #{tpu_custom_call.1} parent=0
    _
  %s11 = ssub.s32 1, %s9
  %s12 = scalar_select 0, %s11, %s9
  $region1: #{tpu_custom_call.1} parent=0
    #allocation2 [shape = 'u8[16384]{0}', space=vmem, size = 0x4000, scoped, tag = 'input window, operand 0']
    #allocation3 [shape = 's32[2]{0}', space=sflag, size = 0x8, scoped, tag = 'scoped memory for tpu_custom_call.1']
    #allocation4 [shape = 's32[2]{0}', space=sflag, size = 0x8, scoped, tag = 'scoped memory for tpu_custom_call.1']
    #allocation5 [shape = 'u8[32768]{0}', space=vmem, size = 0x8000, scoped, tag = 'input window, operand 1, single buffered']
    #allocation6 [shape = 's32[1]{0}', space=sflag, size = 0x4, scoped, tag = 'scoped memory for tpu_custom_call.1']
    #allocation7 [shape = 'u8[32768]{0}', space=vmem, size = 0x8000, scoped, tag = 'input window, operand 3, single buffered']
    #allocation8 [shape = 'u8[8192]{0}', space=vmem, size = 0x2000, scoped, tag = 'input window, operand 5']
    #allocation9 [shape = 's32[2]{0}', space=sflag, size = 0x8, scoped, tag = 'scoped memory for tpu_custom_call.1']
    #allocation10 [shape = 'u8[8192]{0}', space=vmem, size = 0x2000, scoped, tag = 'input window, operand 6, single buffered']
    #allocation11 [shape = 'u8[65536]{0}', space=vmem, size = 0x10000, scoped, tag = 'input window, operand 7, single buffered']
    #allocation12 [shape = 's32[1]{0}', space=sflag, size = 0x4, scoped, tag = 'scoped memory for tpu_custom_call.1']
    #allocation13 [shape = 'u8[16384]{0}', space=vmem, size = 0x4000, scoped, tag = 'output window, operand 0']
    %13 = vsyncpa [#allocation3], 0
    %s14 = scalar_lea.sflag [#allocation3], 1
    %15 = vsyncpa %s14, 0
    %16 = vsyncpa [#allocation6], 0
    %17 = vsyncpa [#allocation9], 0
    %s18 = scalar_lea.sflag [#allocation9], 1
    %19 = vsyncpa %s18, 0
    %20 = vsyncpa [#allocation12], 0
    %21 = vsyncpa [#allocation4], 0
    %s22 = scalar_lea.sflag [#allocation4], 1
    %23 = vsyncpa %s22, 0
    loop: start=0, step=1, limit=4
    $region2: #{tpu_custom_call.1} parent=1 // loop_pre_header
      _
    $region3: #{tpu_custom_call.1} parent=1 // loop_header
      %s25 = sphi 0, %s29
      %p26 = scmp.ge.s32.totalorder %s25, 4
      %s35 = sphi 0, %s37
      %s38 = sphi 0, %s35
      %s39 = sphi 0, %s38
      %s55 = sphi 0, %s39
      %s59 = sphi 0, %s59
      %s61 = sphi 0, %s59
      %s62 = sphi 0, %s61
      %s76 = sphi 0, %s62
      %s80 = sphi 0, %s80
      %s82 = sphi 0, %s80
      %s83 = sphi 0, %s82
      %s97 = sphi 0, %s83
      %s101 = sphi 0, %s101
      %s103 = sphi 0, %s101
      %s104 = sphi 0, %s103
      %s118 = sphi 0, %s104
      %s122 = sphi 0, %s122
      %s124 = sphi 0, %s122
      %s125 = sphi 0, %s124
      %s139 = sphi 0, %s125
      %s145 = sphi 0, %s147
      %s148 = sphi 0, %s145
      %s149 = sphi 0, %s148
      %s165 = sphi 0, %s149
      %s169 = sphi 0, %s169
      %s171 = sphi 0, %s169
      %s172 = sphi 0, %s171
      %s186 = sphi 0, %s172
      %s190 = sphi 0, %s190
      %s192 = sphi 0, %s190
      %s193 = sphi 0, %s192
      %s207 = sphi 0, %s193
      %s213 = sphi 0, %s215
      %s216 = sphi 0, %s213
      %s217 = sphi 0, %s216
      %s233 = sphi 0, %s217
    $region4: #{tpu_custom_call.1} parent=1 // loop_header_branch
      %28 = sbr.rel (%p26) target = $region8
    $region5: #{tpu_custom_call.1} parent=1 // loop_body
      %s30 = ssub.s32 %s25, 1
      %s31 = ssub.s32 %s25, 2
      %s32 = sadd.s32 %s25, 1
      %s33 = ssub.s32 %s25, %s32
      %p34 = scmp.eq.s32.totalorder %s33, 0
      %s36 = sadd.s32 %s35, 1
      %s37 = scalar_select %p34, %s35, %s36
      %p40 = pneg %p34
      %p41 = scmp.eq.s32.totalorder %s25, 1
      %p42 = por %p40, %p41
      %p43 = scmp.ne.s32.totalorder %s35, %s38
      %p44 = scmp.eq.s32.totalorder %s25, 0
      %p45 = por %p43, %p44
      %p46 = scmp.ne.s32.totalorder %s35, %s38
      %p47 = scmp.eq.s32.totalorder %s30, 1
      %p48 = por %p46, %p47
      %p49 = scmp.ne.s32.totalorder %s38, %s39
      %p50 = scmp.eq.s32.totalorder %s30, 0
      %p51 = por %p49, %p50
      %p52 = scmp.ne.s32.totalorder %s38, %s39
      %p53 = scmp.eq.s32.totalorder %s31, 1
      %p54 = por %p52, %p53
      %p56 = scmp.ne.s32.totalorder %s39, %s55
      %p57 = scmp.eq.s32.totalorder %s31, 0
      %p58 = por %p56, %p57
      %s60 = sadd.s32 %s59, 1
      %p63 = scmp.eq.s32.totalorder %s25, 1
      %p64 = scmp.ne.s32.totalorder %s59, %s61
      %p65 = scmp.eq.s32.totalorder %s25, 0
      %p66 = por %p64, %p65
      %p67 = scmp.ne.s32.totalorder %s59, %s61
      %p68 = scmp.eq.s32.totalorder %s30, 1
      %p69 = por %p67, %p68
      %p70 = scmp.ne.s32.totalorder %s61, %s62
      %p71 = scmp.eq.s32.totalorder %s30, 0
      %p72 = por %p70, %p71
      %p73 = scmp.ne.s32.totalorder %s61, %s62
      %p74 = scmp.eq.s32.totalorder %s31, 1
      %p75 = por %p73, %p74
      %p77 = scmp.ne.s32.totalorder %s62, %s76
      %p78 = scmp.eq.s32.totalorder %s31, 0
      %p79 = por %p77, %p78
      %s81 = sadd.s32 %s80, 1
      %p84 = scmp.eq.s32.totalorder %s25, 1
      %p85 = scmp.ne.s32.totalorder %s80, %s82
      %p86 = scmp.eq.s32.totalorder %s25, 0
      %p87 = por %p85, %p86
      %p88 = scmp.ne.s32.totalorder %s80, %s82
      %p89 = scmp.eq.s32.totalorder %s30, 1
      %p90 = por %p88, %p89
      %p91 = scmp.ne.s32.totalorder %s82, %s83
      %p92 = scmp.eq.s32.totalorder %s30, 0
      %p93 = por %p91, %p92
      %p94 = scmp.ne.s32.totalorder %s82, %s83
      %p95 = scmp.eq.s32.totalorder %s31, 1
      %p96 = por %p94, %p95
      %p98 = scmp.ne.s32.totalorder %s83, %s97
      %p99 = scmp.eq.s32.totalorder %s31, 0
      %p100 = por %p98, %p99
      %s102 = sadd.s32 %s101, 1
      %p105 = scmp.eq.s32.totalorder %s25, 1
      %p106 = scmp.ne.s32.totalorder %s101, %s103
      %p107 = scmp.eq.s32.totalorder %s25, 0
      %p108 = por %p106, %p107
      %p109 = scmp.ne.s32.totalorder %s101, %s103
      %p110 = scmp.eq.s32.totalorder %s30, 1
      %p111 = por %p109, %p110
      %p112 = scmp.ne.s32.totalorder %s103, %s104
      %p113 = scmp.eq.s32.totalorder %s30, 0
      %p114 = por %p112, %p113
      %p115 = scmp.ne.s32.totalorder %s103, %s104
      %p116 = scmp.eq.s32.totalorder %s31, 1
      %p117 = por %p115, %p116
      %p119 = scmp.ne.s32.totalorder %s104, %s118
      %p120 = scmp.eq.s32.totalorder %s31, 0
      %p121 = por %p119, %p120
      %s123 = sadd.s32 %s122, 1
      %p126 = scmp.eq.s32.totalorder %s25, 1
      %p127 = scmp.ne.s32.totalorder %s122, %s124
      %p128 = scmp.eq.s32.totalorder %s25, 0
      %p129 = por %p127, %p128
      %p130 = scmp.ne.s32.totalorder %s122, %s124
      %p131 = scmp.eq.s32.totalorder %s30, 1
      %p132 = por %p130, %p131
      %p133 = scmp.ne.s32.totalorder %s124, %s125
      %p134 = scmp.eq.s32.totalorder %s30, 0
      %p135 = por %p133, %p134
      %p136 = scmp.ne.s32.totalorder %s124, %s125
      %p137 = scmp.eq.s32.totalorder %s31, 1
      %p138 = por %p136, %p137
      %p140 = scmp.ne.s32.totalorder %s125, %s139
      %p141 = scmp.eq.s32.totalorder %s31, 0
      %p142 = por %p140, %p141
      %s143 = ssub.s32 %s25, %s32
      %p144 = scmp.eq.s32.totalorder %s143, 0
      %s146 = sadd.s32 %s145, 1
      %s147 = scalar_select %p144, %s145, %s146
      %p150 = pneg %p144
      %p151 = scmp.eq.s32.totalorder %s25, 1
      %p152 = por %p150, %p151
      %p153 = scmp.ne.s32.totalorder %s145, %s148
      %p154 = scmp.eq.s32.totalorder %s25, 0
      %p155 = por %p153, %p154
      %p156 = scmp.ne.s32.totalorder %s145, %s148
      %p157 = scmp.eq.s32.totalorder %s30, 1
      %p158 = por %p156, %p157
      %p159 = scmp.ne.s32.totalorder %s148, %s149
      %p160 = scmp.eq.s32.totalorder %s30, 0
      %p161 = por %p159, %p160
      %p162 = scmp.ne.s32.totalorder %s148, %s149
      %p163 = scmp.eq.s32.totalorder %s31, 1
      %p164 = por %p162, %p163
      %p166 = scmp.ne.s32.totalorder %s149, %s165
      %p167 = scmp.eq.s32.totalorder %s31, 0
      %p168 = por %p166, %p167
      %s170 = sadd.s32 %s169, 1
      %p173 = scmp.eq.s32.totalorder %s25, 1
      %p174 = scmp.ne.s32.totalorder %s169, %s171
      %p175 = scmp.eq.s32.totalorder %s25, 0
      %p176 = por %p174, %p175
      %p177 = scmp.ne.s32.totalorder %s169, %s171
      %p178 = scmp.eq.s32.totalorder %s30, 1
      %p179 = por %p177, %p178
      %p180 = scmp.ne.s32.totalorder %s171, %s172
      %p181 = scmp.eq.s32.totalorder %s30, 0
      %p182 = por %p180, %p181
      %p183 = scmp.ne.s32.totalorder %s171, %s172
      %p184 = scmp.eq.s32.totalorder %s31, 1
      %p185 = por %p183, %p184
      %p187 = scmp.ne.s32.totalorder %s172, %s186
      %p188 = scmp.eq.s32.totalorder %s31, 0
      %p189 = por %p187, %p188
      %s191 = sadd.s32 %s190, 1
      %p194 = scmp.eq.s32.totalorder %s25, 1
      %p195 = scmp.ne.s32.totalorder %s190, %s192
      %p196 = scmp.eq.s32.totalorder %s25, 0
      %p197 = por %p195, %p196
      %p198 = scmp.ne.s32.totalorder %s190, %s192
      %p199 = scmp.eq.s32.totalorder %s30, 1
      %p200 = por %p198, %p199
      %p201 = scmp.ne.s32.totalorder %s192, %s193
      %p202 = scmp.eq.s32.totalorder %s30, 0
      %p203 = por %p201, %p202
      %p204 = scmp.ne.s32.totalorder %s192, %s193
      %p205 = scmp.eq.s32.totalorder %s31, 1
      %p206 = por %p204, %p205
      %p208 = scmp.ne.s32.totalorder %s193, %s207
      %p209 = scmp.eq.s32.totalorder %s31, 0
      %p210 = por %p208, %p209
      %s211 = ssub.s32 %s25, %s32
      %p212 = scmp.eq.s32.totalorder %s211, 0
      %s214 = sadd.s32 %s213, 1
      %s215 = scalar_select %p212, %s213, %s214
      %p218 = pneg %p212
      %p219 = scmp.eq.s32.totalorder %s25, 1
      %p220 = por %p218, %p219
      %p221 = scmp.ne.s32.totalorder %s213, %s216
      %p222 = scmp.eq.s32.totalorder %s25, 0
      %p223 = por %p221, %p222
      %p224 = scmp.ne.s32.totalorder %s213, %s216
      %p225 = scmp.eq.s32.totalorder %s30, 1
      %p226 = por %p224, %p225
      %p227 = scmp.ne.s32.totalorder %s216, %s217
      %p228 = scmp.eq.s32.totalorder %s30, 0
      %p229 = por %p227, %p228
      %p230 = scmp.ne.s32.totalorder %s216, %s217
      %p231 = scmp.eq.s32.totalorder %s31, 1
      %p232 = por %p230, %p231
      %p234 = scmp.ne.s32.totalorder %s217, %s233
      %p235 = scmp.eq.s32.totalorder %s31, 0
      %p236 = por %p234, %p235
      %p237 = scmp.le.s32.totalorder 1, %s25
      %p238 = scmp.lt.s32.totalorder %s25, 3
      %p239 = pnand %p237, %p238
      %p240 = pneg %p239
      // Predicated region
      $region9: #{tpu_custom_call.1} parent=5 // pred_check
        _
      $region10: #{tpu_custom_call.1} parent=5 // pred_check_branch
        %242 = sbr.rel (%p239) target = $region12
      $region11: #{tpu_custom_call.1} parent=5 // pred_region
        %s243 = ssub.s32 %s25, 1
        // Predicated region
        $region13: #{tpu_custom_call.1} parent=11 // pred_check
          %p244 = pneg %p72
        $region14: #{tpu_custom_call.1} parent=11 // pred_check_branch
          %246 = sbr.rel (%p244) target = $region16
        $region15: #{tpu_custom_call.1} parent=11 // pred_region
          %248 = vsyncadd [#allocation6], 0
          %s249 = sshll.u32 %s1, 4
          %s250 = int_to_ptr.hbm [resolvable:$true] %s249
          %s251 = sshll.u32 [#allocation5], 4
          %s252 = int_to_ptr.vmem [resolvable:$true] %s251
          %257 = dma.hbm_to_vmem [thread:$0]  %s250, 1024, %s252, [#allocation6], 128, 128, 8
        $region16: #{tpu_custom_call.1} parent=11 // pred_fallthru
          _
        // Predicated region
        $region17: #{tpu_custom_call.1} parent=11 // pred_check
          %p258 = pneg %p93
        $region18: #{tpu_custom_call.1} parent=11 // pred_check_branch
          %260 = sbr.rel (%p258) target = $region20
        $region19: #{tpu_custom_call.1} parent=11 // pred_region
          _
        $region20: #{tpu_custom_call.1} parent=11 // pred_fallthru
          _
        // Predicated region
        $region21: #{tpu_custom_call.1} parent=11 // pred_check
          %p261 = pneg %p114
        $region22: #{tpu_custom_call.1} parent=11 // pred_check_branch
          %263 = sbr.rel (%p261) target = $region24
        $region23: #{tpu_custom_call.1} parent=11 // pred_region
          %265 = vsyncadd [#allocation6], 0
          %s266 = sshll.u32 %s3, 4
          %s267 = int_to_ptr.hbm [resolvable:$true] %s266
          %s268 = sshll.u32 [#allocation7], 4
          %s269 = int_to_ptr.vmem [resolvable:$true] %s268
          %274 = dma.hbm_to_vmem [thread:$0]  %s267, 1024, %s269, [#allocation6], 128, 128, 8
        $region24: #{tpu_custom_call.1} parent=11 // pred_fallthru
          _
        // Predicated region
        $region25: #{tpu_custom_call.1} parent=11 // pred_check
          %p275 = pneg %p135
        $region26: #{tpu_custom_call.1} parent=11 // pred_check_branch
          %277 = sbr.rel (%p275) target = $region28
        $region27: #{tpu_custom_call.1} parent=11 // pred_region
          _
        $region28: #{tpu_custom_call.1} parent=11 // pred_fallthru
          _
        // Predicated region
        $region29: #{tpu_custom_call.1} parent=11 // pred_check
          %p278 = pneg %p182
        $region30: #{tpu_custom_call.1} parent=11 // pred_check_branch
          %280 = sbr.rel (%p278) target = $region32
        $region31: #{tpu_custom_call.1} parent=11 // pred_region
          %282 = vsyncadd [#allocation9], 0
          %s283 = sshll.u32 %s6, 4
          %s284 = int_to_ptr.hbm [resolvable:$true] %s283
          %s285 = sshll.u32 [#allocation10], 4
          %s286 = int_to_ptr.vmem [resolvable:$true] %s285
          %291 = dma.hbm_to_vmem [thread:$0]  %s284, 256, %s286, [#allocation9], 128, 128, 8
        $region32: #{tpu_custom_call.1} parent=11 // pred_fallthru
          _
        // Predicated region
        $region33: #{tpu_custom_call.1} parent=11 // pred_check
          %p292 = pneg %p203
        $region34: #{tpu_custom_call.1} parent=11 // pred_check_branch
          %294 = sbr.rel (%p292) target = $region36
        $region35: #{tpu_custom_call.1} parent=11 // pred_region
          %296 = vsyncadd [#allocation12], 0
          %s297 = sshll.u32 %s7, 4
          %s298 = int_to_ptr.hbm [resolvable:$true] %s297
          %s299 = sshll.u32 [#allocation11], 4
          %s300 = int_to_ptr.vmem [resolvable:$true] %s299
          %305 = dma.hbm_to_vmem [thread:$0]  %s298, 2048, %s300, [#allocation12], 128, 128, 8
        $region36: #{tpu_custom_call.1} parent=11 // pred_fallthru
          _
      $region12: #{tpu_custom_call.1} parent=5 // pred_fallthru
        _
      %p306 = scmp.lt.s32.totalorder %s25, 2
      // Predicated region
      $region37: #{tpu_custom_call.1} parent=5 // pred_check
        %p307 = pneg %p306
      $region38: #{tpu_custom_call.1} parent=5 // pred_check_branch
        %309 = sbr.rel (%p307) target = $region40
      $region39: #{tpu_custom_call.1} parent=5 // pred_region
        // Predicated region
        $region41: #{tpu_custom_call.1} parent=39 // pred_check
          %p310 = pneg %p45
        $region42: #{tpu_custom_call.1} parent=39 // pred_check_branch
          %312 = sbr.rel (%p310) target = $region44
        $region43: #{tpu_custom_call.1} parent=39 // pred_region
          %s313 = sand.u32 %s35, 1
          %s314 = scalar_lea.sflag [#allocation3], %s313
          %s315 = sand.u32 %s35, 1
          %s316 = smul.addr %s315, 16
          %s317 = scalar_lea.vmem [#allocation2], %s316
          %s318 = smul.u32 2, %s25
          %320 = vsyncadd %s314, 0
          %s321 = smul.addr %s318, 8
          %s322 = scalar_lea.hbm %s0, %s321
          %s323 = sshll.u32 %s322, 4
          %s324 = int_to_ptr.hbm [resolvable:$true] %s323
          %s325 = sshll.u32 %s317, 4
          %s326 = int_to_ptr.vmem [resolvable:$true] %s325
          %331 = dma.hbm_to_vmem [thread:$0]  %s324, 256, %s326, %s314, 128, 128, 8
        $region44: #{tpu_custom_call.1} parent=39 // pred_fallthru
          _
        // Predicated region
        $region45: #{tpu_custom_call.1} parent=39 // pred_check
          %p332 = pneg %p155
        $region46: #{tpu_custom_call.1} parent=39 // pred_check_branch
          %334 = sbr.rel (%p332) target = $region48
        $region47: #{tpu_custom_call.1} parent=39 // pred_region
          %s335 = sand.u32 %s25, 1
          %s336 = scalar_lea.sflag [#allocation9], %s335
          %s337 = sand.u32 %s145, 1
          %s338 = smul.addr %s337, 8
          %s339 = scalar_lea.vmem [#allocation8], %s338
          %s340 = smul.u32 2, %s25
          %342 = vsyncadd %s336, 0
          %s343 = smul.addr %s340, 4
          %s344 = scalar_lea.hbm %s5, %s343
          %s345 = sshll.u32 %s344, 4
          %s346 = int_to_ptr.hbm [resolvable:$true] %s345
          %s347 = sshll.u32 %s339, 4
          %s348 = int_to_ptr.vmem [resolvable:$true] %s347
          %353 = dma.hbm_to_vmem [thread:$0]  %s346, 128, %s348, %s336, 64, 64, 4
        $region48: #{tpu_custom_call.1} parent=39 // pred_fallthru
          _
      $region40: #{tpu_custom_call.1} parent=5 // pred_fallthru
        _
      %p354 = scmp.le.s32.totalorder 1, %s25
      %p355 = scmp.lt.s32.totalorder %s25, 3
      %p356 = pnand %p354, %p355
      %p357 = pneg %p356
      // Predicated region
      $region49: #{tpu_custom_call.1} parent=5 // pred_check
        _
      $region50: #{tpu_custom_call.1} parent=5 // pred_check_branch
        %359 = sbr.rel (%p356) target = $region52
      $region51: #{tpu_custom_call.1} parent=5 // pred_region
        %s360 = ssub.s32 %s25, 1
        %s361 = sand.u32 %s38, 1
        %s362 = scalar_lea.sflag [#allocation3], %s361
        %s363 = sand.u32 %s38, 1
        %s364 = smul.addr %s363, 16
        %s365 = scalar_lea.vmem [#allocation2], %s364
        // Predicated region
        $region53: #{tpu_custom_call.1} parent=51 // pred_check
          %p366 = pneg %p51
        $region54: #{tpu_custom_call.1} parent=51 // pred_check_branch
          %368 = sbr.rel (%p366) target = $region56
        $region55: #{tpu_custom_call.1} parent=51 // pred_region
          %370 = dma.done %s362, 256
        $region56: #{tpu_custom_call.1} parent=51 // pred_fallthru
          _
        // Predicated region
        $region57: #{tpu_custom_call.1} parent=51 // pred_check
          %p371 = pneg %p72
        $region58: #{tpu_custom_call.1} parent=51 // pred_check_branch
          %373 = sbr.rel (%p371) target = $region60
        $region59: #{tpu_custom_call.1} parent=51 // pred_region
          %375 = dma.done [#allocation6], 1024
        $region60: #{tpu_custom_call.1} parent=51 // pred_fallthru
          _
        // Predicated region
        $region61: #{tpu_custom_call.1} parent=51 // pred_check
          %p376 = pneg %p114
        $region62: #{tpu_custom_call.1} parent=51 // pred_check_branch
          %378 = sbr.rel (%p376) target = $region64
        $region63: #{tpu_custom_call.1} parent=51 // pred_region
          %380 = dma.done [#allocation6], 1024
        $region64: #{tpu_custom_call.1} parent=51 // pred_fallthru
          _
        %s381 = sand.u32 %s30, 1
        %s382 = scalar_lea.sflag [#allocation9], %s381
        %s383 = sand.u32 %s148, 1
        %s384 = smul.addr %s383, 8
        %s385 = scalar_lea.vmem [#allocation8], %s384
        // Predicated region
        $region65: #{tpu_custom_call.1} parent=51 // pred_check
          %p386 = pneg %p161
        $region66: #{tpu_custom_call.1} parent=51 // pred_check_branch
          %388 = sbr.rel (%p386) target = $region68
        $region67: #{tpu_custom_call.1} parent=51 // pred_region
          %390 = dma.done %s382, 128
        $region68: #{tpu_custom_call.1} parent=51 // pred_fallthru
          _
        // Predicated region
        $region69: #{tpu_custom_call.1} parent=51 // pred_check
          %p391 = pneg %p182
        $region70: #{tpu_custom_call.1} parent=51 // pred_check_branch
          %393 = sbr.rel (%p391) target = $region72
        $region71: #{tpu_custom_call.1} parent=51 // pred_region
          %395 = dma.done [#allocation9], 256
        $region72: #{tpu_custom_call.1} parent=51 // pred_fallthru
          _
        // Predicated region
        $region73: #{tpu_custom_call.1} parent=51 // pred_check
          %p396 = pneg %p203
        $region74: #{tpu_custom_call.1} parent=51 // pred_check_branch
          %398 = sbr.rel (%p396) target = $region76
        $region75: #{tpu_custom_call.1} parent=51 // pred_region
          %400 = dma.done [#allocation12], 2048
        $region76: #{tpu_custom_call.1} parent=51 // pred_fallthru
          _
        %s401 = sand.u32 %s38, 1
        %s402 = scalar_lea.sflag [#allocation3], %s401
        %s403 = sand.u32 %s38, 1
        %s404 = smul.addr %s403, 16
        %s405 = scalar_lea.vmem [#allocation2], %s404
        %p406 = pneg %p51
        %p407 = pneg %p48
        %p408 = pneg %p72
        %p409 = pneg %p69
        %p410 = pneg %p93
        %p411 = pneg %p90
        %p412 = pneg %p114
        %p413 = pneg %p111
        %p414 = pneg %p135
        %p415 = pneg %p132
        %s416 = sand.u32 %s30, 1
        %s417 = scalar_lea.sflag [#allocation9], %s416
        %s418 = sand.u32 %s148, 1
        %s419 = smul.addr %s418, 8
        %s420 = scalar_lea.vmem [#allocation8], %s419
        %p421 = pneg %p161
        %p422 = pneg %p158
        %p423 = pneg %p182
        %p424 = pneg %p179
        %p425 = pneg %p203
        %p426 = pneg %p200
        %p427 = pneg %p229
        %p428 = pneg %p226
        %s429 = sand.u32 %s216, 1
        %s430 = scalar_lea.sflag [#allocation4], %s429
        %s431 = sand.u32 %s216, 1
        %s432 = smul.addr %s431, 16
        %s433 = scalar_lea.vmem [#allocation13], %s432
        %s434 = smul.u32 2, %s30
        %s435 = smul.u32 2, %s30
        %s436 = smul.u32 2, %s30
        %v437 = vld [vmem:[%s365] sm:$0xff]
        %v438 = vld [vmem:[%s365 + $0x8] sm:$0xff]
        %v439 = vld [vmem:[#allocation5] sm:$0xff]
        %v440 = vld [vmem:[#allocation5 + $0x8] sm:$0xff]
        %v441 = vld [vmem:[#allocation5 + $0x10] sm:$0xff]
        %v442 = vld [vmem:[#allocation5 + $0x18] sm:$0xff]
        %v443 = vld [vmem:[#allocation5 + $0x20] sm:$0xff]
        %v444 = vld [vmem:[#allocation5 + $0x28] sm:$0xff]
        %v445 = vld [vmem:[#allocation5 + $0x30] sm:$0xff]
        %v446 = vld [vmem:[#allocation5 + $0x38] sm:$0xff]
        %v447 = vld [vmem:[%s2] sm:$0x1]
        %v449 = vperm.slane %v447, 0
        %vm451 = vcmask 523264
        %v453 = vsel %vm451, %v437, 0
        %v456 = vsel %vm451, %v438, 0
        %458 = vmatpush.msra.mxu0 0.0
        %459 = vmatpush.msra.mxu0 0.0
        %460 = vmatpush.msra.mxu0 0.0
        %461 = vmatpush.msra.mxu0 0.0
        %462 = vmatpush.msra.mxu0 0.0
        %463 = vmatpush.msra.mxu0 0.0
        %464 = vmatpush.msra.mxu0 0.0
        %465 = vmatpush.msra.mxu0 0.0
        %466 = vmatpush.msra.mxu0 %v446
        %467 = vmatpush.msra.mxu0 %v445
        %468 = vmatpush.msra.mxu0 %v444
        %469 = vmatpush.msra.mxu0 %v443
        %470 = vmatpush.msra.mxu0 %v442
        %471 = vmatpush.msra.mxu0 %v441
        %472 = vmatpush.msra.mxu0 %v440
        %473 = vmatpush.msra.mxu0 %v439
        %474 = vmatmul.f32.gmra.mxu0 %v453
        %v475 = vpop.f32.mrf.mxu0
        %v476 = vadd.f32 %v449, %v475
        %477 = vmatmul.f32.gmra.mxu0 %v456
        %v478 = vpop.f32.mrf.mxu0
        %v479 = vadd.f32 %v449, %v478
        %480 = vdwg.mxu0
        %v481 = vtanh.pop %v476
        %v482 = vtanh.pop %v479
        %v483 = vld [vmem:[#allocation7] sm:$0xff]
        %v484 = vld [vmem:[#allocation7 + $0x8] sm:$0xff]
        %v485 = vld [vmem:[#allocation7 + $0x10] sm:$0xff]
        %v486 = vld [vmem:[#allocation7 + $0x18] sm:$0xff]
        %v487 = vld [vmem:[#allocation7 + $0x20] sm:$0xff]
        %v488 = vld [vmem:[#allocation7 + $0x28] sm:$0xff]
        %v489 = vld [vmem:[#allocation7 + $0x30] sm:$0xff]
        %v490 = vld [vmem:[#allocation7 + $0x38] sm:$0xff]
        %v491 = vld [vmem:[%s4] sm:$0x1]
        %v493 = vperm.slane %v491, 0
        %v496 = vsel %vm451, %v481, 0
        %v499 = vsel %vm451, %v482, 0
        %501 = vmatpush.msra.mxu0 0.0
        %502 = vmatpush.msra.mxu0 0.0
        %503 = vmatpush.msra.mxu0 0.0
        %504 = vmatpush.msra.mxu0 0.0
        %505 = vmatpush.msra.mxu0 0.0
        %506 = vmatpush.msra.mxu0 0.0
        %507 = vmatpush.msra.mxu0 0.0
        %508 = vmatpush.msra.mxu0 0.0
        %509 = vmatpush.msra.mxu0 %v490
        %510 = vmatpush.msra.mxu0 %v489
        %511 = vmatpush.msra.mxu0 %v488
        %512 = vmatpush.msra.mxu0 %v487
        %513 = vmatpush.msra.mxu0 %v486
        %514 = vmatpush.msra.mxu0 %v485
        %515 = vmatpush.msra.mxu0 %v484
        %516 = vmatpush.msra.mxu0 %v483
        %517 = vmatmul.f32.gmra.mxu0 %v496
        %v518 = vpop.f32.mrf.mxu0
        %v519 = vadd.f32 %v493, %v518
        %520 = vmatmul.f32.gmra.mxu0 %v499
        %v521 = vpop.f32.mrf.mxu0
        %v522 = vadd.f32 %v493, %v521
        %523 = vdwg.mxu0
        %v524 = vld [vmem:[%s385] sm:$0xf]
        %v525 = vld [vmem:[%s385 + $0x4] sm:$0xf]
        %v526 = vunpack.c.l.bf16 %v524
        %v527 = vunpack.c.l.bf16 %v525
        %v528 = vmax.f32 %v519, 0.0
        %v529 = vmax.f32 %v522, 0.0
        %v530 = vadd.f32 %v528, %v526
        %v531 = vadd.f32 %v529, %v527
        %v532 = vadd.f32 %v530, 0.6931472
        %v533 = vadd.f32 %v531, 0.6931472
        %536 = vrot.lane.b32.xlu0 %v532, 120
        %v537 = vpop.permute.xlu0 %536
        %538 = vrot.lane.b32.xlu0 %v533, 120
        %v539 = vpop.permute.xlu0 %538
        %542 = vrot.lane.b32.xlu0 %v532, 112
        %v543 = vpop.permute.xlu0 %542
        %544 = vrot.lane.b32.xlu0 %v533, 112
        %v545 = vpop.permute.xlu0 %544
        %548 = vrot.lane.b32.xlu0 %v532, 104
        %v549 = vpop.permute.xlu0 %548
        %550 = vrot.lane.b32.xlu0 %v533, 104
        %v551 = vpop.permute.xlu0 %550
        %554 = vrot.lane.b32.xlu0 %v532, 96
        %v555 = vpop.permute.xlu0 %554
        %556 = vrot.lane.b32.xlu0 %v533, 96
        %v557 = vpop.permute.xlu0 %556
        %560 = vrot.lane.b32.xlu0 %v532, 88
        %v561 = vpop.permute.xlu0 %560
        %562 = vrot.lane.b32.xlu0 %v533, 88
        %v563 = vpop.permute.xlu0 %562
        %566 = vrot.lane.b32.xlu0 %v532, 80
        %v567 = vpop.permute.xlu0 %566
        %568 = vrot.lane.b32.xlu0 %v533, 80
        %v569 = vpop.permute.xlu0 %568
        %572 = vrot.lane.b32.xlu0 %v532, 72
        %v573 = vpop.permute.xlu0 %572
        %574 = vrot.lane.b32.xlu0 %v533, 72
        %v575 = vpop.permute.xlu0 %574
        %578 = vrot.lane.b32.xlu0 %v532, 64
        %v579 = vpop.permute.xlu0 %578
        %580 = vrot.lane.b32.xlu0 %v533, 64
        %v581 = vpop.permute.xlu0 %580
        %584 = vrot.lane.b32.xlu0 %v532, 56
        %v585 = vpop.permute.xlu0 %584
        %586 = vrot.lane.b32.xlu0 %v533, 56
        %v587 = vpop.permute.xlu0 %586
        %590 = vrot.lane.b32.xlu0 %v532, 48
        %v591 = vpop.permute.xlu0 %590
        %592 = vrot.lane.b32.xlu0 %v533, 48
        %v593 = vpop.permute.xlu0 %592
        %596 = vrot.lane.b32.xlu0 %v532, 40
        %v597 = vpop.permute.xlu0 %596
        %598 = vrot.lane.b32.xlu0 %v533, 40
        %v599 = vpop.permute.xlu0 %598
        %602 = vrot.lane.b32.xlu0 %v532, 32
        %v603 = vpop.permute.xlu0 %602
        %604 = vrot.lane.b32.xlu0 %v533, 32
        %v605 = vpop.permute.xlu0 %604
        %608 = vrot.lane.b32.xlu0 %v532, 24
        %v609 = vpop.permute.xlu0 %608
        %610 = vrot.lane.b32.xlu0 %v533, 24
        %v611 = vpop.permute.xlu0 %610
        %614 = vrot.lane.b32.xlu0 %v532, 16
        %v615 = vpop.permute.xlu0 %614
        %616 = vrot.lane.b32.xlu0 %v533, 16
        %v617 = vpop.permute.xlu0 %616
        %620 = vrot.lane.b32.xlu0 %v532, 8
        %v621 = vpop.permute.xlu0 %620
        %622 = vrot.lane.b32.xlu0 %v533, 8
        %v623 = vpop.permute.xlu0 %622
        %v626 = vrot.slane %v543, 4
        %vm627 = vcmask 1047556
        %v628 = vsel %vm627, %v626, %v532
        %v629 = vrot.slane %v532, 4
        %v630 = vsel %vm627, %v543, %v629
        %v632 = vunpack.c.l.s4 1983009808
        %v633 = vunpack.c.0.s8 %v632
        %v634 = vperm.slane %v628, %v633
        %v636 = vunpack.c.l.s4 1983009808
        %v637 = vunpack.c.0.s8 %v636
        %v638 = vperm.slane %v630, %v637
        %v639 = vrot.slane %v549, 4
        %v640 = vsel %vm627, %v639, %v537
        %v641 = vrot.slane %v537, 4
        %v642 = vsel %vm627, %v549, %v641
        %v644 = vunpack.c.l.s4 1983009808
        %v645 = vunpack.c.0.s8 %v644
        %v646 = vperm.slane %v640, %v645
        %v648 = vunpack.c.l.s4 1983009808
        %v649 = vunpack.c.0.s8 %v648
        %v650 = vperm.slane %v642, %v649
        %v651 = vrot.slane %v567, 4
        %v652 = vsel %vm627, %v651, %v555
        %v653 = vrot.slane %v555, 4
        %v654 = vsel %vm627, %v567, %v653
        %v656 = vunpack.c.l.s4 1983009808
        %v657 = vunpack.c.0.s8 %v656
        %v658 = vperm.slane %v652, %v657
        %v660 = vunpack.c.l.s4 1983009808
        %v661 = vunpack.c.0.s8 %v660
        %v662 = vperm.slane %v654, %v661
        %v663 = vrot.slane %v573, 4
        %v664 = vsel %vm627, %v663, %v561
        %v665 = vrot.slane %v561, 4
        %v666 = vsel %vm627, %v573, %v665
        %v668 = vunpack.c.l.s4 1983009808
        %v669 = vunpack.c.0.s8 %v668
        %v670 = vperm.slane %v664, %v669
        %v672 = vunpack.c.l.s4 1983009808
        %v673 = vunpack.c.0.s8 %v672
        %v674 = vperm.slane %v666, %v673
        %v675 = vrot.slane %v646, 4
        %v676 = vsel %vm627, %v675, %v634
        %v677 = vrot.slane %v634, 4
        %v678 = vsel %vm627, %v646, %v677
        %v680 = vunpack.c.l.s4 1934713408
        %v681 = vunpack.c.0.s8 %v680
        %v682 = vperm.slane %v676, %v681
        %v684 = vunpack.c.l.s4 1934713408
        %v685 = vunpack.c.0.s8 %v684
        %v686 = vperm.slane %v678, %v685
        %v687 = vrot.slane %v650, 4
        %v688 = vsel %vm627, %v687, %v638
        %v689 = vrot.slane %v638, 4
        %v690 = vsel %vm627, %v650, %v689
        %v692 = vunpack.c.l.s4 1934713408
        %v693 = vunpack.c.0.s8 %v692
        %v694 = vperm.slane %v688, %v693
        %v696 = vunpack.c.l.s4 1934713408
        %v697 = vunpack.c.0.s8 %v696
        %v698 = vperm.slane %v690, %v697
        %v699 = vrot.slane %v670, 4
        %v700 = vsel %vm627, %v699, %v658
        %v701 = vrot.slane %v658, 4
        %v702 = vsel %vm627, %v670, %v701
        %v704 = vunpack.c.l.s4 1934713408
        %v705 = vunpack.c.0.s8 %v704
        %v706 = vperm.slane %v700, %v705
        %v708 = vunpack.c.l.s4 1934713408
        %v709 = vunpack.c.0.s8 %v708
        %v710 = vperm.slane %v702, %v709
        %v711 = vrot.slane %v674, 4
        %v712 = vsel %vm627, %v711, %v662
        %v713 = vrot.slane %v662, 4
        %v714 = vsel %vm627, %v674, %v713
        %v716 = vunpack.c.l.s4 1934713408
        %v717 = vunpack.c.0.s8 %v716
        %v718 = vperm.slane %v712, %v717
        %v720 = vunpack.c.l.s4 1934713408
        %v721 = vunpack.c.0.s8 %v720
        %v722 = vperm.slane %v714, %v721
        %v723 = vrot.slane %v706, 4
        %v724 = vsel %vm627, %v723, %v682
        %v725 = vrot.slane %v682, 4
        %v726 = vsel %vm627, %v706, %v725
        %v727 = vrot.slane %v710, 4
        %v728 = vsel %vm627, %v727, %v686
        %v729 = vrot.slane %v686, 4
        %v730 = vsel %vm627, %v710, %v729
        %v731 = vrot.slane %v718, 4
        %v732 = vsel %vm627, %v731, %v694
        %v733 = vrot.slane %v694, 4
        %v734 = vsel %vm627, %v718, %v733
        %v735 = vrot.slane %v722, 4
        %v736 = vsel %vm627, %v735, %v698
        %v737 = vrot.slane %v698, 4
        %v738 = vsel %vm627, %v722, %v737
        %v739 = vrot.slane %v591, 4
        %v740 = vsel %vm627, %v739, %v579
        %v741 = vrot.slane %v579, 4
        %v742 = vsel %vm627, %v591, %v741
        %v744 = vunpack.c.l.s4 1983009808
        %v745 = vunpack.c.0.s8 %v744
        %v746 = vperm.slane %v740, %v745
        %v748 = vunpack.c.l.s4 1983009808
        %v749 = vunpack.c.0.s8 %v748
        %v750 = vperm.slane %v742, %v749
        %v751 = vrot.slane %v597, 4
        %v752 = vsel %vm627, %v751, %v585
        %v753 = vrot.slane %v585, 4
        %v754 = vsel %vm627, %v597, %v753
        %v756 = vunpack.c.l.s4 1983009808
        %v757 = vunpack.c.0.s8 %v756
        %v758 = vperm.slane %v752, %v757
        %v760 = vunpack.c.l.s4 1983009808
        %v761 = vunpack.c.0.s8 %v760
        %v762 = vperm.slane %v754, %v761
        %v763 = vrot.slane %v615, 4
        %v764 = vsel %vm627, %v763, %v603
        %v765 = vrot.slane %v603, 4
        %v766 = vsel %vm627, %v615, %v765
        %v768 = vunpack.c.l.s4 1983009808
        %v769 = vunpack.c.0.s8 %v768
        %v770 = vperm.slane %v764, %v769
        %v772 = vunpack.c.l.s4 1983009808
        %v773 = vunpack.c.0.s8 %v772
        %v774 = vperm.slane %v766, %v773
        %v775 = vrot.slane %v621, 4
        %v776 = vsel %vm627, %v775, %v609
        %v777 = vrot.slane %v609, 4
        %v778 = vsel %vm627, %v621, %v777
        %v780 = vunpack.c.l.s4 1983009808
        %v781 = vunpack.c.0.s8 %v780
        %v782 = vperm.slane %v776, %v781
        %v784 = vunpack.c.l.s4 1983009808
        %v785 = vunpack.c.0.s8 %v784
        %v786 = vperm.slane %v778, %v785
        %v787 = vrot.slane %v758, 4
        %v788 = vsel %vm627, %v787, %v746
        %v789 = vrot.slane %v746, 4
        %v790 = vsel %vm627, %v758, %v789
        %v792 = vunpack.c.l.s4 1934713408
        %v793 = vunpack.c.0.s8 %v792
        %v794 = vperm.slane %v788, %v793
        %v796 = vunpack.c.l.s4 1934713408
        %v797 = vunpack.c.0.s8 %v796
        %v798 = vperm.slane %v790, %v797
        %v799 = vrot.slane %v762, 4
        %v800 = vsel %vm627, %v799, %v750
        %v801 = vrot.slane %v750, 4
        %v802 = vsel %vm627, %v762, %v801
        %v804 = vunpack.c.l.s4 1934713408
        %v805 = vunpack.c.0.s8 %v804
        %v806 = vperm.slane %v800, %v805
        %v808 = vunpack.c.l.s4 1934713408
        %v809 = vunpack.c.0.s8 %v808
        %v810 = vperm.slane %v802, %v809
        %v811 = vrot.slane %v782, 4
        %v812 = vsel %vm627, %v811, %v770
        %v813 = vrot.slane %v770, 4
        %v814 = vsel %vm627, %v782, %v813
        %v816 = vunpack.c.l.s4 1934713408
        %v817 = vunpack.c.0.s8 %v816
        %v818 = vperm.slane %v812, %v817
        %v820 = vunpack.c.l.s4 1934713408
        %v821 = vunpack.c.0.s8 %v820
        %v822 = vperm.slane %v814, %v821
        %v823 = vrot.slane %v786, 4
        %v824 = vsel %vm627, %v823, %v774
        %v825 = vrot.slane %v774, 4
        %v826 = vsel %vm627, %v786, %v825
        %v828 = vunpack.c.l.s4 1934713408
        %v829 = vunpack.c.0.s8 %v828
        %v830 = vperm.slane %v824, %v829
        %v832 = vunpack.c.l.s4 1934713408
        %v833 = vunpack.c.0.s8 %v832
        %v834 = vperm.slane %v826, %v833
        %v835 = vrot.slane %v818, 4
        %v836 = vsel %vm627, %v835, %v794
        %v837 = vrot.slane %v794, 4
        %v838 = vsel %vm627, %v818, %v837
        %v839 = vrot.slane %v822, 4
        %v840 = vsel %vm627, %v839, %v798
        %v841 = vrot.slane %v798, 4
        %v842 = vsel %vm627, %v822, %v841
        %v843 = vrot.slane %v830, 4
        %v844 = vsel %vm627, %v843, %v806
        %v845 = vrot.slane %v806, 4
        %v846 = vsel %vm627, %v830, %v845
        %v847 = vrot.slane %v834, 4
        %v848 = vsel %vm627, %v847, %v810
        %v849 = vrot.slane %v810, 4
        %v850 = vsel %vm627, %v834, %v849
        %v851 = vrot.slane %v545, 4
        %v852 = vsel %vm627, %v851, %v533
        %v853 = vrot.slane %v533, 4
        %v854 = vsel %vm627, %v545, %v853
        %v856 = vunpack.c.l.s4 1983009808
        %v857 = vunpack.c.0.s8 %v856
        %v858 = vperm.slane %v852, %v857
        %v860 = vunpack.c.l.s4 1983009808
        %v861 = vunpack.c.0.s8 %v860
        %v862 = vperm.slane %v854, %v861
        %v863 = vrot.slane %v551, 4
        %v864 = vsel %vm627, %v863, %v539
        %v865 = vrot.slane %v539, 4
        %v866 = vsel %vm627, %v551, %v865
        %v868 = vunpack.c.l.s4 1983009808
        %v869 = vunpack.c.0.s8 %v868
        %v870 = vperm.slane %v864, %v869
        %v872 = vunpack.c.l.s4 1983009808
        %v873 = vunpack.c.0.s8 %v872
        %v874 = vperm.slane %v866, %v873
        %v875 = vrot.slane %v569, 4
        %v876 = vsel %vm627, %v875, %v557
        %v877 = vrot.slane %v557, 4
        %v878 = vsel %vm627, %v569, %v877
        %v880 = vunpack.c.l.s4 1983009808
        %v881 = vunpack.c.0.s8 %v880
        %v882 = vperm.slane %v876, %v881
        %v884 = vunpack.c.l.s4 1983009808
        %v885 = vunpack.c.0.s8 %v884
        %v886 = vperm.slane %v878, %v885
        %v887 = vrot.slane %v575, 4
        %v888 = vsel %vm627, %v887, %v563
        %v889 = vrot.slane %v563, 4
        %v890 = vsel %vm627, %v575, %v889
        %v892 = vunpack.c.l.s4 1983009808
        %v893 = vunpack.c.0.s8 %v892
        %v894 = vperm.slane %v888, %v893
        %v896 = vunpack.c.l.s4 1983009808
        %v897 = vunpack.c.0.s8 %v896
        %v898 = vperm.slane %v890, %v897
        %v899 = vrot.slane %v870, 4
        %v900 = vsel %vm627, %v899, %v858
        %v901 = vrot.slane %v858, 4
        %v902 = vsel %vm627, %v870, %v901
        %v904 = vunpack.c.l.s4 1934713408
        %v905 = vunpack.c.0.s8 %v904
        %v906 = vperm.slane %v900, %v905
        %v908 = vunpack.c.l.s4 1934713408
        %v909 = vunpack.c.0.s8 %v908
        %v910 = vperm.slane %v902, %v909
        %v911 = vrot.slane %v874, 4
        %v912 = vsel %vm627, %v911, %v862
        %v913 = vrot.slane %v862, 4
        %v914 = vsel %vm627, %v874, %v913
        %v916 = vunpack.c.l.s4 1934713408
        %v917 = vunpack.c.0.s8 %v916
        %v918 = vperm.slane %v912, %v917
        %v920 = vunpack.c.l.s4 1934713408
        %v921 = vunpack.c.0.s8 %v920
        %v922 = vperm.slane %v914, %v921
        %v923 = vrot.slane %v894, 4
        %v924 = vsel %vm627, %v923, %v882
        %v925 = vrot.slane %v882, 4
        %v926 = vsel %vm627, %v894, %v925
        %v928 = vunpack.c.l.s4 1934713408
        %v929 = vunpack.c.0.s8 %v928
        %v930 = vperm.slane %v924, %v929
        %v932 = vunpack.c.l.s4 1934713408
        %v933 = vunpack.c.0.s8 %v932
        %v934 = vperm.slane %v926, %v933
        %v935 = vrot.slane %v898, 4
        %v936 = vsel %vm627, %v935, %v886
        %v937 = vrot.slane %v886, 4
        %v938 = vsel %vm627, %v898, %v937
        %v940 = vunpack.c.l.s4 1934713408
        %v941 = vunpack.c.0.s8 %v940
        %v942 = vperm.slane %v936, %v941
        %v944 = vunpack.c.l.s4 1934713408
        %v945 = vunpack.c.0.s8 %v944
        %v946 = vperm.slane %v938, %v945
        %v947 = vrot.slane %v930, 4
        %v948 = vsel %vm627, %v947, %v906
        %v949 = vrot.slane %v906, 4
        %v950 = vsel %vm627, %v930, %v949
        %v951 = vrot.slane %v934, 4
        %v952 = vsel %vm627, %v951, %v910
        %v953 = vrot.slane %v910, 4
        %v954 = vsel %vm627, %v934, %v953
        %v955 = vrot.slane %v942, 4
        %v956 = vsel %vm627, %v955, %v918
        %v957 = vrot.slane %v918, 4
        %v958 = vsel %vm627, %v942, %v957
        %v959 = vrot.slane %v946, 4
        %v960 = vsel %vm627, %v959, %v922
        %v961 = vrot.slane %v922, 4
        %v962 = vsel %vm627, %v946, %v961
        %v963 = vrot.slane %v593, 4
        %v964 = vsel %vm627, %v963, %v581
        %v965 = vrot.slane %v581, 4
        %v966 = vsel %vm627, %v593, %v965
        %v968 = vunpack.c.l.s4 1983009808
        %v969 = vunpack.c.0.s8 %v968
        %v970 = vperm.slane %v964, %v969
        %v972 = vunpack.c.l.s4 1983009808
        %v973 = vunpack.c.0.s8 %v972
        %v974 = vperm.slane %v966, %v973
        %v975 = vrot.slane %v599, 4
        %v976 = vsel %vm627, %v975, %v587
        %v977 = vrot.slane %v587, 4
        %v978 = vsel %vm627, %v599, %v977
        %v980 = vunpack.c.l.s4 1983009808
        %v981 = vunpack.c.0.s8 %v980
        %v982 = vperm.slane %v976, %v981
        %v984 = vunpack.c.l.s4 1983009808
        %v985 = vunpack.c.0.s8 %v984
        %v986 = vperm.slane %v978, %v985
        %v987 = vrot.slane %v617, 4
        %v988 = vsel %vm627, %v987, %v605
        %v989 = vrot.slane %v605, 4
        %v990 = vsel %vm627, %v617, %v989
        %v992 = vunpack.c.l.s4 1983009808
        %v993 = vunpack.c.0.s8 %v992
        %v994 = vperm.slane %v988, %v993
        %v996 = vunpack.c.l.s4 1983009808
        %v997 = vunpack.c.0.s8 %v996
        %v998 = vperm.slane %v990, %v997
        %v999 = vrot.slane %v623, 4
        %v1000 = vsel %vm627, %v999, %v611
        %v1001 = vrot.slane %v611, 4
        %v1002 = vsel %vm627, %v623, %v1001
        %v1004 = vunpack.c.l.s4 1983009808
        %v1005 = vunpack.c.0.s8 %v1004
        %v1006 = vperm.slane %v1000, %v1005
        %v1008 = vunpack.c.l.s4 1983009808
        %v1009 = vunpack.c.0.s8 %v1008
        %v1010 = vperm.slane %v1002, %v1009
        %v1011 = vrot.slane %v982, 4
        %v1012 = vsel %vm627, %v1011, %v970
        %v1013 = vrot.slane %v970, 4
        %v1014 = vsel %vm627, %v982, %v1013
        %v1016 = vunpack.c.l.s4 1934713408
        %v1017 = vunpack.c.0.s8 %v1016
        %v1018 = vperm.slane %v1012, %v1017
        %v1020 = vunpack.c.l.s4 1934713408
        %v1021 = vunpack.c.0.s8 %v1020
        %v1022 = vperm.slane %v1014, %v1021
        %v1023 = vrot.slane %v986, 4
        %v1024 = vsel %vm627, %v1023, %v974
        %v1025 = vrot.slane %v974, 4
        %v1026 = vsel %vm627, %v986, %v1025
        %v1028 = vunpack.c.l.s4 1934713408
        %v1029 = vunpack.c.0.s8 %v1028
        %v1030 = vperm.slane %v1024, %v1029
        %v1032 = vunpack.c.l.s4 1934713408
        %v1033 = vunpack.c.0.s8 %v1032
        %v1034 = vperm.slane %v1026, %v1033
        %v1035 = vrot.slane %v1006, 4
        %v1036 = vsel %vm627, %v1035, %v994
        %v1037 = vrot.slane %v994, 4
        %v1038 = vsel %vm627, %v1006, %v1037
        %v1040 = vunpack.c.l.s4 1934713408
        %v1041 = vunpack.c.0.s8 %v1040
        %v1042 = vperm.slane %v1036, %v1041
        %v1044 = vunpack.c.l.s4 1934713408
        %v1045 = vunpack.c.0.s8 %v1044
        %v1046 = vperm.slane %v1038, %v1045
        %v1047 = vrot.slane %v1010, 4
        %v1048 = vsel %vm627, %v1047, %v998
        %v1049 = vrot.slane %v998, 4
        %v1050 = vsel %vm627, %v1010, %v1049
        %v1052 = vunpack.c.l.s4 1934713408
        %v1053 = vunpack.c.0.s8 %v1052
        %v1054 = vperm.slane %v1048, %v1053
        %v1056 = vunpack.c.l.s4 1934713408
        %v1057 = vunpack.c.0.s8 %v1056
        %v1058 = vperm.slane %v1050, %v1057
        %v1059 = vrot.slane %v1042, 4
        %v1060 = vsel %vm627, %v1059, %v1018
        %v1061 = vrot.slane %v1018, 4
        %v1062 = vsel %vm627, %v1042, %v1061
        %v1063 = vrot.slane %v1046, 4
        %v1064 = vsel %vm627, %v1063, %v1022
        %v1065 = vrot.slane %v1022, 4
        %v1066 = vsel %vm627, %v1046, %v1065
        %v1067 = vrot.slane %v1054, 4
        %v1068 = vsel %vm627, %v1067, %v1030
        %v1069 = vrot.slane %v1030, 4
        %v1070 = vsel %vm627, %v1054, %v1069
        %v1071 = vrot.slane %v1058, 4
        %v1072 = vsel %vm627, %v1071, %v1034
        %v1073 = vrot.slane %v1034, 4
        %v1074 = vsel %vm627, %v1058, %v1073
        %vm1075 = vcmask 64512
        %v1076 = vsel %vm1075, %v724, -inf
        %1077 = vmax.xlane.f32.xlu0 %v1076
        %v1078 = vpop.xlane.xlu0 %1077
        %v1079 = vsel %vm1075, %v836, -inf
        %1080 = vmax.xlane.f32.xlu0 %v1079
        %v1081 = vpop.xlane.xlu0 %1080
        %v1082 = vsel %vm1075, %v726, -inf
        %1083 = vmax.xlane.f32.xlu0 %v1082
        %v1084 = vpop.xlane.xlu0 %1083
        %v1085 = vsel %vm1075, %v838, -inf
        %1086 = vmax.xlane.f32.xlu0 %v1085
        %v1087 = vpop.xlane.xlu0 %1086
        %v1088 = vsel %vm1075, %v728, -inf
        %1089 = vmax.xlane.f32.xlu0 %v1088
        %v1090 = vpop.xlane.xlu0 %1089
        %v1091 = vsel %vm1075, %v840, -inf
        %1092 = vmax.xlane.f32.xlu0 %v1091
        %v1093 = vpop.xlane.xlu0 %1092
        %v1094 = vsel %vm1075, %v730, -inf
        %1095 = vmax.xlane.f32.xlu0 %v1094
        %v1096 = vpop.xlane.xlu0 %1095
        %v1097 = vsel %vm1075, %v842, -inf
        %1098 = vmax.xlane.f32.xlu0 %v1097
        %v1099 = vpop.xlane.xlu0 %1098
        %v1100 = vsel %vm1075, %v732, -inf
        %1101 = vmax.xlane.f32.xlu0 %v1100
        %v1102 = vpop.xlane.xlu0 %1101
        %v1103 = vsel %vm1075, %v844, -inf
        %1104 = vmax.xlane.f32.xlu0 %v1103
        %v1105 = vpop.xlane.xlu0 %1104
        %v1106 = vsel %vm1075, %v734, -inf
        %1107 = vmax.xlane.f32.xlu0 %v1106
        %v1108 = vpop.xlane.xlu0 %1107
        %v1109 = vsel %vm1075, %v846, -inf
        %1110 = vmax.xlane.f32.xlu0 %v1109
        %v1111 = vpop.xlane.xlu0 %1110
        %v1112 = vsel %vm1075, %v736, -inf
        %1113 = vmax.xlane.f32.xlu0 %v1112
        %v1114 = vpop.xlane.xlu0 %1113
        %v1115 = vsel %vm1075, %v848, -inf
        %1116 = vmax.xlane.f32.xlu0 %v1115
        %v1117 = vpop.xlane.xlu0 %1116
        %v1118 = vsel %vm1075, %v738, -inf
        %1119 = vmax.xlane.f32.xlu0 %v1118
        %v1120 = vpop.xlane.xlu0 %1119
        %v1121 = vsel %vm1075, %v850, -inf
        %1122 = vmax.xlane.f32.xlu0 %v1121
        %v1123 = vpop.xlane.xlu0 %1122
        %v1124 = vsel %vm1075, %v948, -inf
        %1125 = vmax.xlane.f32.xlu0 %v1124
        %v1126 = vpop.xlane.xlu0 %1125
        %v1127 = vsel %vm1075, %v1060, -inf
        %1128 = vmax.xlane.f32.xlu0 %v1127
        %v1129 = vpop.xlane.xlu0 %1128
        %v1130 = vsel %vm1075, %v950, -inf
        %1131 = vmax.xlane.f32.xlu0 %v1130
        %v1132 = vpop.xlane.xlu0 %1131
        %v1133 = vsel %vm1075, %v1062, -inf
        %1134 = vmax.xlane.f32.xlu0 %v1133
        %v1135 = vpop.xlane.xlu0 %1134
        %v1136 = vsel %vm1075, %v952, -inf
        %1137 = vmax.xlane.f32.xlu0 %v1136
        %v1138 = vpop.xlane.xlu0 %1137
        %v1139 = vsel %vm1075, %v1064, -inf
        %1140 = vmax.xlane.f32.xlu0 %v1139
        %v1141 = vpop.xlane.xlu0 %1140
        %v1142 = vsel %vm1075, %v954, -inf
        %1143 = vmax.xlane.f32.xlu0 %v1142
        %v1144 = vpop.xlane.xlu0 %1143
        %v1145 = vsel %vm1075, %v1066, -inf
        %1146 = vmax.xlane.f32.xlu0 %v1145
        %v1147 = vpop.xlane.xlu0 %1146
        %v1148 = vsel %vm1075, %v956, -inf
        %1149 = vmax.xlane.f32.xlu0 %v1148
        %v1150 = vpop.xlane.xlu0 %1149
        %v1151 = vsel %vm1075, %v1068, -inf
        %1152 = vmax.xlane.f32.xlu0 %v1151
        %v1153 = vpop.xlane.xlu0 %1152
        %v1154 = vsel %vm1075, %v958, -inf
        %1155 = vmax.xlane.f32.xlu0 %v1154
        %v1156 = vpop.xlane.xlu0 %1155
        %v1157 = vsel %vm1075, %v1070, -inf
        %1158 = vmax.xlane.f32.xlu0 %v1157
        %v1159 = vpop.xlane.xlu0 %1158
        %v1160 = vsel %vm1075, %v960, -inf
        %1161 = vmax.xlane.f32.xlu0 %v1160
        %v1162 = vpop.xlane.xlu0 %1161
        %v1163 = vsel %vm1075, %v1072, -inf
        %1164 = vmax.xlane.f32.xlu0 %v1163
        %v1165 = vpop.xlane.xlu0 %1164
        %v1166 = vsel %vm1075, %v962, -inf
        %1167 = vmax.xlane.f32.xlu0 %v1166
        %v1168 = vpop.xlane.xlu0 %1167
        %v1169 = vsel %vm1075, %v1074, -inf
        %1170 = vmax.xlane.f32.xlu0 %v1169
        %v1171 = vpop.xlane.xlu0 %1170
        %v1172 = vld [vmem:[#allocation10] sm:$0xff]
        %v1173 = vld [vmem:[#allocation10 + $0x8] sm:$0xff]
        %v1206 = vlaneseq
        %v1207 = vand.u32 %v1206, 127
        %v1208 = vperm.slane %v1078, %v1207
        %v1209 = vadd.s32 %v1207, 4294967288
        %v1210 = vperm.slane %v1081, %v1209
        %vm1211 = vcmask 130112
        %v1212 = vsel %vm1211, %v1210, %v1208
        %v1213 = vperm.slane %v1084, %v1207
        %v1214 = vperm.slane %v1087, %v1209
        %v1215 = vsel %vm1211, %v1214, %v1213
        %v1216 = vperm.slane %v1090, %v1207
        %v1217 = vperm.slane %v1093, %v1209
        %v1218 = vsel %vm1211, %v1217, %v1216
        %v1219 = vperm.slane %v1096, %v1207
        %v1220 = vperm.slane %v1099, %v1209
        %v1221 = vsel %vm1211, %v1220, %v1219
        %v1222 = vperm.slane %v1102, %v1207
        %v1223 = vperm.slane %v1105, %v1209
        %v1224 = vsel %vm1211, %v1223, %v1222
        %v1225 = vperm.slane %v1108, %v1207
        %v1226 = vperm.slane %v1111, %v1209
        %v1227 = vsel %vm1211, %v1226, %v1225
        %v1228 = vperm.slane %v1114, %v1207
        %v1229 = vperm.slane %v1117, %v1209
        %v1230 = vsel %vm1211, %v1229, %v1228
        %v1231 = vperm.slane %v1120, %v1207
        %v1232 = vperm.slane %v1123, %v1209
        %v1233 = vsel %vm1211, %v1232, %v1231
        %v1234 = vperm.slane %v1126, %v1207
        %v1235 = vperm.slane %v1129, %v1209
        %v1236 = vsel %vm1211, %v1235, %v1234
        %v1237 = vperm.slane %v1132, %v1207
        %v1238 = vperm.slane %v1135, %v1209
        %v1239 = vsel %vm1211, %v1238, %v1237
        %v1240 = vperm.slane %v1138, %v1207
        %v1241 = vperm.slane %v1141, %v1209
        %v1242 = vsel %vm1211, %v1241, %v1240
        %v1243 = vperm.slane %v1144, %v1207
        %v1244 = vperm.slane %v1147, %v1209
        %v1245 = vsel %vm1211, %v1244, %v1243
        %v1246 = vperm.slane %v1150, %v1207
        %v1247 = vperm.slane %v1153, %v1209
        %v1248 = vsel %vm1211, %v1247, %v1246
        %v1249 = vperm.slane %v1156, %v1207
        %v1250 = vperm.slane %v1159, %v1209
        %v1251 = vsel %vm1211, %v1250, %v1249
        %v1252 = vperm.slane %v1162, %v1207
        %v1253 = vperm.slane %v1165, %v1209
        %v1254 = vsel %vm1211, %v1253, %v1252
        %v1255 = vperm.slane %v1168, %v1207
        %v1256 = vperm.slane %v1171, %v1209
        %v1257 = vsel %vm1211, %v1256, %v1255
        %vm1258 = vcmask 1041409
        %v1259 = vsel %vm1258, %v1215, %v1212
        %vm1260 = vcmask 1042434
        %v1261 = vsel %vm1260, %v1218, %v1259
        %vm1262 = vcmask 1043459
        %v1263 = vsel %vm1262, %v1221, %v1261
        %vm1264 = vcmask 1044484
        %v1265 = vsel %vm1264, %v1224, %v1263
        %vm1266 = vcmask 1045509
        %v1267 = vsel %vm1266, %v1227, %v1265
        %vm1268 = vcmask 1046534
        %v1269 = vsel %vm1268, %v1230, %v1267
        %vm1270 = vcmask 1047559
        %v1271 = vsel %vm1270, %v1233, %v1269
        %v1272 = vsel %vm1258, %v1239, %v1236
        %v1273 = vsel %vm1260, %v1242, %v1272
        %v1274 = vsel %vm1262, %v1245, %v1273
        %v1275 = vsel %vm1264, %v1248, %v1274
        %v1276 = vsel %vm1266, %v1251, %v1275
        %v1277 = vsel %vm1268, %v1254, %v1276
        %v1278 = vsel %vm1270, %v1257, %v1277
        %vm1279 = vcmask 130048
        %v1280 = vsel %vm1279, %v1271, 0
        %v1282 = vsel %vm1279, %v1278, 0
        %1284 = vmatpush.msra.mxu0 0.0
        %1285 = vmatpush.msra.mxu0 0.0
        %1286 = vmatpush.msra.mxu0 0.0
        %1287 = vmatpush.msra.mxu0 0.0
        %1288 = vmatpush.msra.mxu0 0.0
        %1289 = vmatpush.msra.mxu0 0.0
        %1290 = vmatpush.msra.mxu0 0.0
        %1291 = vmatpush.msra.mxu0 0.0
        %1292 = vmatpush.msra.mxu0 0.0
        %1293 = vmatpush.msra.mxu0 0.0
        %1294 = vmatpush.msra.mxu0 0.0
        %1295 = vmatpush.msra.mxu0 0.0
        %1296 = vmatpush.msra.mxu0 0.0
        %1297 = vmatpush.msra.mxu0 0.0
        %1298 = vmatpush.msra.mxu0 %v1173
        %1299 = vmatpush.msra.mxu0 %v1172
        %1300 = vmatmul.f32.gmra.mxu0 %v1280
        %v1301 = vpop.f32.mrf.mxu0
        %v1302 = vadd.f32 0.0, %v1301
        %1303 = vmatmul.f32.gmra.mxu0 %v1282
        %v1304 = vpop.f32.mrf.mxu0
        %v1305 = vadd.f32 0.0, %v1304
        %1306 = vdwg.mxu0
        %v1307 = vsub.f32 %v526, %v1302
        %v1308 = vsub.f32 %v527, %v1305
        %v1309 = vmul.f32 %v1307, 1.442695
        %v1310 = vpow.pop %v1309
        %v1311 = vmul.f32 %v1308, 1.442695
        %v1312 = vpow.pop %v1311
        %v1313 = vadd.f32 %v519, %v1307
        %v1314 = vadd.f32 %v522, %v1308
        %v1315 = vmul.f32 %v1313, 1.442695
        %v1316 = vpow.pop %v1315
        %v1317 = vmul.f32 %v1314, 1.442695
        %v1318 = vpow.pop %v1317
        %v1319 = vadd.f32 %v1310, %v1316
        %v1320 = vadd.f32 %v1312, %v1318
        %v1321 = vmul.f32 %v1319, %v1319
        %v1322 = vmul.f32 %v1320, %v1320
        %v1323 = vmul.f32 %v1321, %v1321
        %v1324 = vmul.f32 %v1322, %v1322
        %v1325 = vmul.f32 %v1323, %v1323
        %v1326 = vmul.f32 %v1324, %v1324
        %v1327 = vmul.f32 %v1325, %v1321
        %v1328 = vmul.f32 %v1326, %v1322
        %v1329 = vld [vmem:[#allocation11] sm:$0xff]
        %v1330 = vld [vmem:[#allocation11 + $0x8] sm:$0xff]
        %v1331 = vld [vmem:[#allocation11 + $0x10] sm:$0xff]
        %v1332 = vld [vmem:[#allocation11 + $0x18] sm:$0xff]
        %v1333 = vld [vmem:[#allocation11 + $0x20] sm:$0xff]
        %v1334 = vld [vmem:[#allocation11 + $0x28] sm:$0xff]
        %v1335 = vld [vmem:[#allocation11 + $0x30] sm:$0xff]
        %v1336 = vld [vmem:[#allocation11 + $0x38] sm:$0xff]
        %v1337 = vld [vmem:[#allocation11 + $0x40] sm:$0xff]
        %v1338 = vld [vmem:[#allocation11 + $0x48] sm:$0xff]
        %v1339 = vld [vmem:[#allocation11 + $0x50] sm:$0xff]
        %v1340 = vld [vmem:[#allocation11 + $0x58] sm:$0xff]
        %v1341 = vld [vmem:[#allocation11 + $0x60] sm:$0xff]
        %v1342 = vld [vmem:[#allocation11 + $0x68] sm:$0xff]
        %v1343 = vld [vmem:[#allocation11 + $0x70] sm:$0xff]
        %v1344 = vld [vmem:[#allocation11 + $0x78] sm:$0xff]
        %1345 = vmatpush.msra.mxu0 %v1344
        %1346 = vmatpush.msra.mxu0 %v1343
        %1347 = vmatpush.msra.mxu0 %v1342
        %1348 = vmatpush.msra.mxu0 %v1341
        %1349 = vmatpush.msra.mxu0 %v1340
        %1350 = vmatpush.msra.mxu0 %v1339
        %1351 = vmatpush.msra.mxu0 %v1338
        %1352 = vmatpush.msra.mxu0 %v1337
        %1353 = vmatpush.msra.mxu0 %v1336
        %1354 = vmatpush.msra.mxu0 %v1335
        %1355 = vmatpush.msra.mxu0 %v1334
        %1356 = vmatpush.msra.mxu0 %v1333
        %1357 = vmatpush.msra.mxu0 %v1332
        %1358 = vmatpush.msra.mxu0 %v1331
        %1359 = vmatpush.msra.mxu0 %v1330
        %1360 = vmatpush.msra.mxu0 %v1329
        %1361 = vmatmul.f32.gmra.mxu0 %v1327
        %v1362 = vpop.f32.mrf.mxu0
        %v1363 = vadd.f32 0.0, %v1362
        %1364 = vmatmul.f32.gmra.mxu0 %v1328
        %v1365 = vpop.f32.mrf.mxu0
        %v1366 = vadd.f32 0.0, %v1365
        %1367 = vdwg.mxu0
        %v1368 = vrcp.pop %v1363
        %v1369 = vrcp.pop %v1366
        %v1370 = vmul.f32 %v1363, %v1368
        %v1371 = vmul.f32 %v1366, %v1369
        %v1372 = vsub.f32 2.0, %v1370
        %v1373 = vsub.f32 2.0, %v1371
        %v1374 = vmul.f32 %v1368, %v1372
        %v1375 = vmul.f32 %v1369, %v1373
        %v1376 = vmul.f32 %v1327, %v1374
        %v1377 = vmul.f32 %v1328, %v1375
        %1378 = vst [vmem:[%s433] sm:$0xff] %v1376
        %1379 = vst [vmem:[%s433 + $0x8] sm:$0xff] %v1377
        %s1380 = sand.u32 %s216, 1
        %s1381 = scalar_lea.sflag [#allocation4], %s1380
        %s1382 = sand.u32 %s216, 1
        %s1383 = smul.addr %s1382, 16
        %s1384 = scalar_lea.vmem [#allocation13], %s1383
        // Predicated region
        $region77: #{tpu_custom_call.1} parent=51 // pred_check
          %p1385 = pneg %p226
        $region78: #{tpu_custom_call.1} parent=51 // pred_check_branch
          %1387 = sbr.rel (%p1385) target = $region80
        $region79: #{tpu_custom_call.1} parent=51 // pred_region
          %s1388 = smul.u32 2, %s30
          %1390 = vsyncadd %s1381, 0
          %s1391 = smul.addr %s1388, 8
          %s1392 = scalar_lea.hbm %s8, %s1391
          %s1393 = sshll.u32 %s1384, 4
          %s1394 = int_to_ptr.vmem [resolvable:$true] %s1393
          %s1395 = sshll.u32 %s1392, 4
          %s1396 = int_to_ptr.hbm [resolvable:$true] %s1395
          %1401 = dma.vmem_to_hbm [thread:$0]  %s1394, 256, %s1396, %s1381, 128, 128, 8
        $region80: #{tpu_custom_call.1} parent=51 // pred_fallthru
          _
      $region52: #{tpu_custom_call.1} parent=5 // pred_fallthru
        _
      %p1402 = scmp.le.s32.totalorder 2, %s25
      // Predicated region
      $region81: #{tpu_custom_call.1} parent=5 // pred_check
        %p1403 = pneg %p1402
      $region82: #{tpu_custom_call.1} parent=5 // pred_check_branch
        %1405 = sbr.rel (%p1403) target = $region84
      $region83: #{tpu_custom_call.1} parent=5 // pred_region
        %s1406 = ssub.s32 %s25, 2
        // Predicated region
        $region85: #{tpu_custom_call.1} parent=83 // pred_check
          %p1407 = pneg %p232
        $region86: #{tpu_custom_call.1} parent=83 // pred_check_branch
          %1409 = sbr.rel (%p1407) target = $region88
        $region87: #{tpu_custom_call.1} parent=83 // pred_region
          %s1410 = sand.u32 %s217, 1
          %s1411 = scalar_lea.sflag [#allocation4], %s1410
          %s1412 = sand.u32 %s217, 1
          %s1413 = smul.addr %s1412, 16
          %s1414 = scalar_lea.vmem [#allocation13], %s1413
          %1416 = dma.done %s1411, 256
        $region88: #{tpu_custom_call.1} parent=83 // pred_fallthru
          _
      $region84: #{tpu_custom_call.1} parent=5 // pred_fallthru
        _
    $region6: #{tpu_custom_call.1} parent=1 // loop_footer
      %s29 = sadd.s32 1, %s25
    $region7: #{tpu_custom_call.1} parent=1 // loop_footer_branch
      %24 = sbr.rel target = $region3
    $region8: #{tpu_custom_call.1} parent=1 // loop_exit
      _
    %1417 = vsyncpa [#allocation3], 1
    %s1418 = scalar_lea.sflag [#allocation3], 1
    %1419 = vsyncpa %s1418, 1
    %1420 = vsyncpa [#allocation6], 1
    %1421 = vsyncpa [#allocation9], 1
    %s1422 = scalar_lea.sflag [#allocation9], 1
    %1423 = vsyncpa %s1422, 1
    %1424 = vsyncpa [#allocation12], 1
    %1425 = vsyncpa [#allocation4], 1
    %s1426 = scalar_lea.sflag [#allocation4], 1
    %1427 = vsyncpa %s1426, 1

</llo_original>
